<compile_context>
chip_gen: v5e
topology: v5e:2x2
jax: 0.10.0
libtpu: 0.0.40
codegen_flags: <defaults>
</compile_context>

<pallas_src>
import jax
import jax.numpy as jnp
from jax import lax
from jax.experimental import pallas as pl
from jax.experimental.pallas import tpu as pltpu

# model hyper-parameters (from the PyTorch module)
EMBEDDING_SIZE = 10
HIDDEN_SIZE = 8
INPUT_SIZE = 4          # vocab size for the embedding
NUM_CLASS = 4
NUM_LAYERS = 2

# ---- packed-parameter slab layout (width = HIDDEN_SIZE, matmul operands 8-row aligned) ----
ROW_W0 = 0        # rows [0, 8): fused emb @ Wih0^T in rows [0, INPUT_SIZE); b0 in row H-1
ROW_WHH0 = 8      # rows [8, 16):  Whh0^T
ROW_WL1 = 16      # rows [16, 32): [Wih1^T ; Whh1^T]   (fused layer-1 contraction)
ROW_FC = 32       # rows [32, 40): fc_w^T in cols [0, NUM_CLASS)
ROW_B1 = 40       # b_ih_l1 + b_hh_l1
ROW_FCB = 41      # fc bias in cols [0, NUM_CLASS)
PACK_ROWS = 48

# the layer-0 bias is routed through the constant-1 one-hot column H-1, so the vocab
# must not reach that column (out-of-range ids would also silently hit zero rows —
# same benign caveat as before; nn.Embedding would instead error).
assert INPUT_SIZE < HIDDEN_SIZE - 1


def rnn_model_kernel(ids_ref, pack_ref, out_ref, h2_buf):
    """Whole forward pass for one (small) batch, fully VMEM-resident, no grid.

    ids_ref : (B*T, 1) int32, row order b*T + t (matches torch's view(-1, C)).
    pack_ref: (PACK_ROWS, H) f32 packed weight slab (see ROW_* layout above).
    out_ref : (B*T, NUM_CLASS) f32.
    h2_buf  : (B, T, H) f32 VMEM scratch collecting layer-2 hidden states.
    """
    f32 = jnp.float32
    B, T, H = h2_buf.shape
    BT = B * T
    C = out_ref.shape[1]

    # ---- unpack the parameter slab (static slices of one loaded value: zero cost) ----
    pack = pack_ref[...]                       # (PACK_ROWS, H)
    w0_aug = pack[ROW_W0:ROW_W0 + H, :]        # (H, H): rows [0,V) = emb@Wih0^T, row H-1 = b0
    whh0t = pack[ROW_WHH0:ROW_WHH0 + H, :]     # (H, H)
    w_l1 = pack[ROW_WL1:ROW_WL1 + 2 * H, :]    # (2H, H) = [Wih1^T ; Whh1^T]
    fcwt = pack[ROW_FC:ROW_FC + H, :]          # (H, H), cols [C,H) are zero
    b1 = pack[ROW_B1:ROW_B1 + 1, :]            # (1, H)
    fcb = pack[ROW_FCB:ROW_FCB + 1, :]         # (1, H), cols [C,H) are zero

    # ---- prologue: fused embedding lookup + layer-0 projection + layer-0 bias ----
    # augmented one-hot: col v = (id == v) for v < V, col H-1 = 1 (picks up b0 row).
    ids = ids_ref[...]                                            # (BT, 1) int32
    col = lax.broadcasted_iota(jnp.int32, (BT, H), 1)
    one_hot_aug = ((ids == col) | (col == H - 1)).astype(f32)     # (BT, H)
    x0 = jnp.dot(one_hot_aug, w0_aug, preferred_element_type=f32)  # (BT, H) = emb[ids]@Wih0^T + b0
    x0 = x0.reshape(B, T, H)

    # hoisted bias broadcast (JAX does not CSE broadcast_in_dim inside the unrolled loop)
    b1_b = jnp.broadcast_to(b1, (B, H))

    h1 = jnp.zeros((B, H), f32)
    h2 = jnp.zeros((B, H), f32)

    # ---- sequential recurrence over time (T is static, unrolled at trace time) ----
    # per step: 1 MXU matmul for the layer-0 recurrence + 1 fused MXU matmul for layer 1.
    for t in range(T):
        h1 = jnp.tanh(x0[:, t, :]
                      + jnp.dot(h1, whh0t, preferred_element_type=f32))      # (B, H)
        z = jnp.concatenate([h1, h2], axis=-1)                               # (B, 2H)
        h2 = jnp.tanh(jnp.dot(z, w_l1, preferred_element_type=f32) + b1_b)   # (B, H)
        h2_buf[:, t, :] = h2          # off the critical path; frees live vregs

    # ---- deferred final Linear: one matmul, one store ----
    h2_all = h2_buf[...].reshape(BT, H)                                      # (BT, H)
    logits = (jnp.dot(h2_all, fcwt, preferred_element_type=f32)
              + jnp.broadcast_to(fcb, (BT, H)))                              # (BT, H), cols [C,H) zero
    out_ref[...] = logits[:, :C]


def pack_params(params):
    """Pack all weights/biases into one (PACK_ROWS, H) f32 slab (weight-only work)."""
    f32 = jnp.float32
    H, V, C = HIDDEN_SIZE, INPUT_SIZE, NUM_CLASS

    # weight-only preprocessing (not activation pre-scaling): fuse emb with layer-0 proj,
    # pre-transpose everything (PyTorch stores (out, in)), block-stack the layer-1 weights.
    w0_fused = jnp.dot(params["emb"], params["w_ih_l0"].T)                    # (V, H)
    whh0t = params["w_hh_l0"].T                                               # (H, H)
    w_l1 = jnp.concatenate([params["w_ih_l1"].T, params["w_hh_l1"].T], 0)     # (2H, H)
    fcwt = params["fc_w"].T                                                   # (H, C)

    pack = jnp.zeros((PACK_ROWS, H), f32)
    pack = pack.at[ROW_W0:ROW_W0 + V, :].set(w0_fused.astype(f32))
    pack = pack.at[ROW_W0 + H - 1, :].set(params["b_l0"].reshape(H).astype(f32))
    pack = pack.at[ROW_WHH0:ROW_WHH0 + H, :].set(whh0t.astype(f32))
    pack = pack.at[ROW_WL1:ROW_WL1 + 2 * H, :].set(w_l1.astype(f32))
    pack = pack.at[ROW_FC:ROW_FC + H, 0:C].set(fcwt.astype(f32))
    pack = pack.at[ROW_B1, :].set(params["b_l1"].reshape(H).astype(f32))
    pack = pack.at[ROW_FCB, 0:C].set(params["fc_b"].reshape(C).astype(f32))
    return pack


def rnn_model_forward(ids, params):
    """ids: (B, T) int32 token indices in [0, INPUT_SIZE). Returns (B*T, NUM_CLASS)."""
    B, T = ids.shape
    BT = B * T

    pack = pack_params(params)                           # (PACK_ROWS, H)
    ids_flat = ids.reshape(BT, 1).astype(jnp.int32)      # row order b*T + t

    vmem = pl.BlockSpec(memory_space=pltpu.MemorySpace.VMEM)

    out = pl.pallas_call(
        rnn_model_kernel,
        out_shape=jax.ShapeDtypeStruct((BT, NUM_CLASS), jnp.float32),
        in_specs=[vmem, vmem],
        out_specs=vmem,
        scratch_shapes=[pltpu.VMEM((B, T, HIDDEN_SIZE), jnp.float32)],
    )(ids_flat, pack)

    return out


def init_params(key):
    """Deterministic synthetic parameters with the same shapes as the nn.Module."""
    ks = jax.random.split(key, 12)
    f32 = jnp.float32
    scale = 0.3
    p = {
        "emb":     jax.random.normal(ks[0], (INPUT_SIZE, EMBEDDING_SIZE), f32) * scale,
        "w_ih_l0": jax.random.normal(ks[1], (HIDDEN_SIZE, EMBEDDING_SIZE), f32) * scale,
        "w_hh_l0": jax.random.normal(ks[2], (HIDDEN_SIZE, HIDDEN_SIZE), f32) * scale,
        # PyTorch RNN has separate b_ih / b_hh; they only ever appear summed.
        "b_l0":    (jax.random.normal(ks[3], (1, HIDDEN_SIZE), f32) * scale
                    + jax.random.normal(ks[4], (1, HIDDEN_SIZE), f32) * scale),
        "w_ih_l1": jax.random.normal(ks[5], (HIDDEN_SIZE, HIDDEN_SIZE), f32) * scale,
        "w_hh_l1": jax.random.normal(ks[6], (HIDDEN_SIZE, HIDDEN_SIZE), f32) * scale,
        "b_l1":    (jax.random.normal(ks[7], (1, HIDDEN_SIZE), f32) * scale
                    + jax.random.normal(ks[8], (1, HIDDEN_SIZE), f32) * scale),
        "fc_w":    jax.random.normal(ks[9], (NUM_CLASS, HIDDEN_SIZE), f32) * scale,
        "fc_b":    jax.random.normal(ks[10], (1, NUM_CLASS), f32) * scale,
    }
    return p


def reference_forward(ids, p):
    """Pure-JAX reference mirroring the PyTorch forward."""
    B, T = ids.shape
    x = p["emb"][ids]                                    # (B, T, E)
    h1 = jnp.zeros((B, HIDDEN_SIZE), jnp.float32)
    h2 = jnp.zeros((B, HIDDEN_SIZE), jnp.float32)
    ys = []
    for t in range(T):
        xt = x[:, t, :]
        h1 = jnp.tanh(xt @ p["w_ih_l0"].T + h1 @ p["w_hh_l0"].T + p["b_l0"])
        h2 = jnp.tanh(h1 @ p["w_ih_l1"].T + h2 @ p["w_hh_l1"].T + p["b_l1"])
        ys.append(h2 @ p["fc_w"].T + p["fc_b"])
    y = jnp.stack(ys, axis=1)                            # (B, T, C)
    return y.reshape(B * T, NUM_CLASS)


if __name__ == "__main__":
    key = jax.random.PRNGKey(0)
    k_ids, k_param = jax.random.split(key)

    B, T = 2, 8
    ids = jax.random.randint(k_ids, (B, T), 0, INPUT_SIZE, dtype=jnp.int32)
    params = init_params(k_param)

    out = rnn_model_forward(ids, params)
    out = jax.block_until_ready(out)

    ref = reference_forward(ids, params)
    assert out.shape == (B * T, NUM_CLASS)
    assert jnp.allclose(out, ref, atol=1e-4, rtol=1e-4), "mismatch vs JAX reference"

    print("KERNEL_OK")
</pallas_src>

<mosaic_0001>
module attributes {stable_mosaic.version = 11 : i64} {
  func.func @rnn_model_kernel(%arg0: memref<16x1xi32, #tpu.memory_space<vmem>>, %arg1: memref<48x8xf32, #tpu.memory_space<vmem>>, %arg2: memref<16x4xf32, #tpu.memory_space<vmem>>, %arg3: memref<2x8x8xf32, #tpu.memory_space<vmem>>) attributes {dimension_semantics = [], scalar_prefetch = 0 : i64, scratch_operands = 1 : i64, tpu.core_type = #tpu.core_type<tc>} {
    %c0 = arith.constant 0 : index
    %c0_0 = arith.constant 0 : index
    %0 = vector.load %arg1[%c0, %c0_0] : memref<48x8xf32, #tpu.memory_space<vmem>>, vector<48x8xf32>
    %1 = vector.extract_strided_slice %0 {offsets = [0, 0], sizes = [8, 8], strides = [1, 1]} : vector<48x8xf32> to vector<8x8xf32>
    %2 = vector.extract_strided_slice %0 {offsets = [8, 0], sizes = [8, 8], strides = [1, 1]} : vector<48x8xf32> to vector<8x8xf32>
    %3 = vector.extract_strided_slice %0 {offsets = [16, 0], sizes = [16, 8], strides = [1, 1]} : vector<48x8xf32> to vector<16x8xf32>
    %4 = vector.extract_strided_slice %0 {offsets = [32, 0], sizes = [8, 8], strides = [1, 1]} : vector<48x8xf32> to vector<8x8xf32>
    %5 = vector.extract_strided_slice %0 {offsets = [40, 0], sizes = [1, 8], strides = [1, 1]} : vector<48x8xf32> to vector<1x8xf32>
    %6 = vector.extract_strided_slice %0 {offsets = [41, 0], sizes = [1, 8], strides = [1, 1]} : vector<48x8xf32> to vector<1x8xf32>
    %c0_1 = arith.constant 0 : index
    %c0_2 = arith.constant 0 : index
    %7 = vector.load %arg0[%c0_1, %c0_2] : memref<16x1xi32, #tpu.memory_space<vmem>>, vector<16x1xi32>
    %8 = tpu.iota {dimensions = array<i32: 1>} : vector<16x8xi32>
    %9 = vector.broadcast %7 : vector<16x1xi32> to vector<16x8xi32>
    %10 = arith.cmpi eq, %9, %8 : vector<16x8xi32>
    %c7_i32 = arith.constant 7 : i32
    %11 = vector.broadcast %c7_i32 : i32 to vector<16x8xi32>
    %12 = arith.cmpi eq, %8, %11 : vector<16x8xi32>
    %13 = arith.ori %10, %12 : vector<16x8xi1>
    %14 = arith.extui %13 : vector<16x8xi1> to vector<16x8xi32>
    %15 = arith.sitofp %14 : vector<16x8xi32> to vector<16x8xf32>
    %cst = arith.constant dense<0.000000e+00> : vector<16x8xf32>
    %16 = tpu.matmul %15, %1, %cst {dimension_numbers = #tpu.dot_dimension_numbers<[1], [0], [0], [1], [0, 0, 1, 1], [], []>} : vector<16x8xf32>, vector<8x8xf32>, vector<16x8xf32> -> vector<16x8xf32>
    %17 = vector.shape_cast %16 : vector<16x8xf32> to vector<2x8x8xf32>
    %18 = vector.shape_cast %5 : vector<1x8xf32> to vector<1x8xf32>
    %19 = vector.broadcast %18 : vector<1x8xf32> to vector<2x8xf32>
    %cst_3 = arith.constant 0.000000e+00 : f32
    %20 = vector.broadcast %cst_3 : f32 to vector<2x8xf32>
    %cst_4 = arith.constant 0.000000e+00 : f32
    %21 = vector.broadcast %cst_4 : f32 to vector<2x8xf32>
    %22 = vector.extract_strided_slice %17 {offsets = [0, 0, 0], sizes = [2, 1, 8], strides = [1, 1, 1]} : vector<2x8x8xf32> to vector<2x1x8xf32>
    %23 = vector.shape_cast %22 : vector<2x1x8xf32> to vector<2x8xf32>
    %cst_5 = arith.constant dense<0.000000e+00> : vector<2x8xf32>
    %24 = tpu.matmul %20, %2, %cst_5 {dimension_numbers = #tpu.dot_dimension_numbers<[1], [0], [0], [1], [0, 0, 1, 1], [], []>} : vector<2x8xf32>, vector<8x8xf32>, vector<2x8xf32> -> vector<2x8xf32>
    %25 = arith.addf %23, %24 : vector<2x8xf32>
    %26 = math.tanh %25 : vector<2x8xf32>
    %27 = tpu.concatenate %26, %21 in 1 : vector<2x8xf32>, vector<2x8xf32> -> vector<2x16xf32>
    %cst_6 = arith.constant dense<0.000000e+00> : vector<2x8xf32>
    %28 = tpu.matmul %27, %3, %cst_6 {dimension_numbers = #tpu.dot_dimension_numbers<[1], [0], [0], [1], [0, 0, 1, 1], [], []>} : vector<2x16xf32>, vector<16x8xf32>, vector<2x8xf32> -> vector<2x8xf32>
    %29 = arith.addf %28, %19 : vector<2x8xf32>
    %30 = math.tanh %29 : vector<2x8xf32>
    %c0_7 = arith.constant 0 : index
    %c0_8 = arith.constant 0 : index
    %c0_9 = arith.constant 0 : index
    %31 = vector.load %arg3[%c0_7, %c0_8, %c0_9] : memref<2x8x8xf32, #tpu.memory_space<vmem>>, vector<2x1x8xf32>
    %32 = vector.shape_cast %31 : vector<2x1x8xf32> to vector<2x8xf32>
    %33 = vector.shape_cast %30 : vector<2x8xf32> to vector<2x1x8xf32>
    tpu.vector_store %arg3[%c0_7, %c0_8, %c0_9], %33 {strides = array<i32>} : memref<2x8x8xf32, #tpu.memory_space<vmem>>, vector<2x1x8xf32>,
    %34 = vector.extract_strided_slice %17 {offsets = [0, 1, 0], sizes = [2, 1, 8], strides = [1, 1, 1]} : vector<2x8x8xf32> to vector<2x1x8xf32>
    %35 = vector.shape_cast %34 : vector<2x1x8xf32> to vector<2x8xf32>
    %cst_10 = arith.constant dense<0.000000e+00> : vector<2x8xf32>
    %36 = tpu.matmul %26, %2, %cst_10 {dimension_numbers = #tpu.dot_dimension_numbers<[1], [0], [0], [1], [0, 0, 1, 1], [], []>} : vector<2x8xf32>, vector<8x8xf32>, vector<2x8xf32> -> vector<2x8xf32>
    %37 = arith.addf %35, %36 : vector<2x8xf32>
    %38 = math.tanh %37 : vector<2x8xf32>
    %39 = tpu.concatenate %38, %30 in 1 : vector<2x8xf32>, vector<2x8xf32> -> vector<2x16xf32>
    %cst_11 = arith.constant dense<0.000000e+00> : vector<2x8xf32>
    %40 = tpu.matmul %39, %3, %cst_11 {dimension_numbers = #tpu.dot_dimension_numbers<[1], [0], [0], [1], [0, 0, 1, 1], [], []>} : vector<2x16xf32>, vector<16x8xf32>, vector<2x8xf32> -> vector<2x8xf32>
    %41 = arith.addf %40, %19 : vector<2x8xf32>
    %42 = math.tanh %41 : vector<2x8xf32>
    %c0_12 = arith.constant 0 : index
    %c1 = arith.constant 1 : index
    %c0_13 = arith.constant 0 : index
    %43 = vector.load %arg3[%c0_12, %c1, %c0_13] : memref<2x8x8xf32, #tpu.memory_space<vmem>>, vector<2x1x8xf32>
    %44 = vector.shape_cast %43 : vector<2x1x8xf32> to vector<2x8xf32>
    %45 = vector.shape_cast %42 : vector<2x8xf32> to vector<2x1x8xf32>
    tpu.vector_store %arg3[%c0_12, %c1, %c0_13], %45 {strides = array<i32>} : memref<2x8x8xf32, #tpu.memory_space<vmem>>, vector<2x1x8xf32>,
    %46 = vector.extract_strided_slice %17 {offsets = [0, 2, 0], sizes = [2, 1, 8], strides = [1, 1, 1]} : vector<2x8x8xf32> to vector<2x1x8xf32>
    %47 = vector.shape_cast %46 : vector<2x1x8xf32> to vector<2x8xf32>
    %cst_14 = arith.constant dense<0.000000e+00> : vector<2x8xf32>
    %48 = tpu.matmul %38, %2, %cst_14 {dimension_numbers = #tpu.dot_dimension_numbers<[1], [0], [0], [1], [0, 0, 1, 1], [], []>} : vector<2x8xf32>, vector<8x8xf32>, vector<2x8xf32> -> vector<2x8xf32>
    %49 = arith.addf %47, %48 : vector<2x8xf32>
    %50 = math.tanh %49 : vector<2x8xf32>
    %51 = tpu.concatenate %50, %42 in 1 : vector<2x8xf32>, vector<2x8xf32> -> vector<2x16xf32>
    %cst_15 = arith.constant dense<0.000000e+00> : vector<2x8xf32>
    %52 = tpu.matmul %51, %3, %cst_15 {dimension_numbers = #tpu.dot_dimension_numbers<[1], [0], [0], [1], [0, 0, 1, 1], [], []>} : vector<2x16xf32>, vector<16x8xf32>, vector<2x8xf32> -> vector<2x8xf32>
    %53 = arith.addf %52, %19 : vector<2x8xf32>
    %54 = math.tanh %53 : vector<2x8xf32>
    %c0_16 = arith.constant 0 : index
    %c2 = arith.constant 2 : index
    %c0_17 = arith.constant 0 : index
    %55 = vector.load %arg3[%c0_16, %c2, %c0_17] : memref<2x8x8xf32, #tpu.memory_space<vmem>>, vector<2x1x8xf32>
    %56 = vector.shape_cast %55 : vector<2x1x8xf32> to vector<2x8xf32>
    %57 = vector.shape_cast %54 : vector<2x8xf32> to vector<2x1x8xf32>
    tpu.vector_store %arg3[%c0_16, %c2, %c0_17], %57 {strides = array<i32>} : memref<2x8x8xf32, #tpu.memory_space<vmem>>, vector<2x1x8xf32>,
    %58 = vector.extract_strided_slice %17 {offsets = [0, 3, 0], sizes = [2, 1, 8], strides = [1, 1, 1]} : vector<2x8x8xf32> to vector<2x1x8xf32>
    %59 = vector.shape_cast %58 : vector<2x1x8xf32> to vector<2x8xf32>
    %cst_18 = arith.constant dense<0.000000e+00> : vector<2x8xf32>
    %60 = tpu.matmul %50, %2, %cst_18 {dimension_numbers = #tpu.dot_dimension_numbers<[1], [0], [0], [1], [0, 0, 1, 1], [], []>} : vector<2x8xf32>, vector<8x8xf32>, vector<2x8xf32> -> vector<2x8xf32>
    %61 = arith.addf %59, %60 : vector<2x8xf32>
    %62 = math.tanh %61 : vector<2x8xf32>
    %63 = tpu.concatenate %62, %54 in 1 : vector<2x8xf32>, vector<2x8xf32> -> vector<2x16xf32>
    %cst_19 = arith.constant dense<0.000000e+00> : vector<2x8xf32>
    %64 = tpu.matmul %63, %3, %cst_19 {dimension_numbers = #tpu.dot_dimension_numbers<[1], [0], [0], [1], [0, 0, 1, 1], [], []>} : vector<2x16xf32>, vector<16x8xf32>, vector<2x8xf32> -> vector<2x8xf32>
    %65 = arith.addf %64, %19 : vector<2x8xf32>
    %66 = math.tanh %65 : vector<2x8xf32>
    %c0_20 = arith.constant 0 : index
    %c3 = arith.constant 3 : index
    %c0_21 = arith.constant 0 : index
    %67 = vector.load %arg3[%c0_20, %c3, %c0_21] : memref<2x8x8xf32, #tpu.memory_space<vmem>>, vector<2x1x8xf32>
    %68 = vector.shape_cast %67 : vector<2x1x8xf32> to vector<2x8xf32>
    %69 = vector.shape_cast %66 : vector<2x8xf32> to vector<2x1x8xf32>
    tpu.vector_store %arg3[%c0_20, %c3, %c0_21], %69 {strides = array<i32>} : memref<2x8x8xf32, #tpu.memory_space<vmem>>, vector<2x1x8xf32>,
    %70 = vector.extract_strided_slice %17 {offsets = [0, 4, 0], sizes = [2, 1, 8], strides = [1, 1, 1]} : vector<2x8x8xf32> to vector<2x1x8xf32>
    %71 = vector.shape_cast %70 : vector<2x1x8xf32> to vector<2x8xf32>
    %cst_22 = arith.constant dense<0.000000e+00> : vector<2x8xf32>
    %72 = tpu.matmul %62, %2, %cst_22 {dimension_numbers = #tpu.dot_dimension_numbers<[1], [0], [0], [1], [0, 0, 1, 1], [], []>} : vector<2x8xf32>, vector<8x8xf32>, vector<2x8xf32> -> vector<2x8xf32>
    %73 = arith.addf %71, %72 : vector<2x8xf32>
    %74 = math.tanh %73 : vector<2x8xf32>
    %75 = tpu.concatenate %74, %66 in 1 : vector<2x8xf32>, vector<2x8xf32> -> vector<2x16xf32>
    %cst_23 = arith.constant dense<0.000000e+00> : vector<2x8xf32>
    %76 = tpu.matmul %75, %3, %cst_23 {dimension_numbers = #tpu.dot_dimension_numbers<[1], [0], [0], [1], [0, 0, 1, 1], [], []>} : vector<2x16xf32>, vector<16x8xf32>, vector<2x8xf32> -> vector<2x8xf32>
    %77 = arith.addf %76, %19 : vector<2x8xf32>
    %78 = math.tanh %77 : vector<2x8xf32>
    %c0_24 = arith.constant 0 : index
    %c4 = arith.constant 4 : index
    %c0_25 = arith.constant 0 : index
    %79 = vector.load %arg3[%c0_24, %c4, %c0_25] : memref<2x8x8xf32, #tpu.memory_space<vmem>>, vector<2x1x8xf32>
    %80 = vector.shape_cast %79 : vector<2x1x8xf32> to vector<2x8xf32>
    %81 = vector.shape_cast %78 : vector<2x8xf32> to vector<2x1x8xf32>
    tpu.vector_store %arg3[%c0_24, %c4, %c0_25], %81 {strides = array<i32>} : memref<2x8x8xf32, #tpu.memory_space<vmem>>, vector<2x1x8xf32>,
    %82 = vector.extract_strided_slice %17 {offsets = [0, 5, 0], sizes = [2, 1, 8], strides = [1, 1, 1]} : vector<2x8x8xf32> to vector<2x1x8xf32>
    %83 = vector.shape_cast %82 : vector<2x1x8xf32> to vector<2x8xf32>
    %cst_26 = arith.constant dense<0.000000e+00> : vector<2x8xf32>
    %84 = tpu.matmul %74, %2, %cst_26 {dimension_numbers = #tpu.dot_dimension_numbers<[1], [0], [0], [1], [0, 0, 1, 1], [], []>} : vector<2x8xf32>, vector<8x8xf32>, vector<2x8xf32> -> vector<2x8xf32>
    %85 = arith.addf %83, %84 : vector<2x8xf32>
    %86 = math.tanh %85 : vector<2x8xf32>
    %87 = tpu.concatenate %86, %78 in 1 : vector<2x8xf32>, vector<2x8xf32> -> vector<2x16xf32>
    %cst_27 = arith.constant dense<0.000000e+00> : vector<2x8xf32>
    %88 = tpu.matmul %87, %3, %cst_27 {dimension_numbers = #tpu.dot_dimension_numbers<[1], [0], [0], [1], [0, 0, 1, 1], [], []>} : vector<2x16xf32>, vector<16x8xf32>, vector<2x8xf32> -> vector<2x8xf32>
    %89 = arith.addf %88, %19 : vector<2x8xf32>
    %90 = math.tanh %89 : vector<2x8xf32>
    %c0_28 = arith.constant 0 : index
    %c5 = arith.constant 5 : index
    %c0_29 = arith.constant 0 : index
    %91 = vector.load %arg3[%c0_28, %c5, %c0_29] : memref<2x8x8xf32, #tpu.memory_space<vmem>>, vector<2x1x8xf32>
    %92 = vector.shape_cast %91 : vector<2x1x8xf32> to vector<2x8xf32>
    %93 = vector.shape_cast %90 : vector<2x8xf32> to vector<2x1x8xf32>
    tpu.vector_store %arg3[%c0_28, %c5, %c0_29], %93 {strides = array<i32>} : memref<2x8x8xf32, #tpu.memory_space<vmem>>, vector<2x1x8xf32>,
    %94 = vector.extract_strided_slice %17 {offsets = [0, 6, 0], sizes = [2, 1, 8], strides = [1, 1, 1]} : vector<2x8x8xf32> to vector<2x1x8xf32>
    %95 = vector.shape_cast %94 : vector<2x1x8xf32> to vector<2x8xf32>
    %cst_30 = arith.constant dense<0.000000e+00> : vector<2x8xf32>
    %96 = tpu.matmul %86, %2, %cst_30 {dimension_numbers = #tpu.dot_dimension_numbers<[1], [0], [0], [1], [0, 0, 1, 1], [], []>} : vector<2x8xf32>, vector<8x8xf32>, vector<2x8xf32> -> vector<2x8xf32>
    %97 = arith.addf %95, %96 : vector<2x8xf32>
    %98 = math.tanh %97 : vector<2x8xf32>
    %99 = tpu.concatenate %98, %90 in 1 : vector<2x8xf32>, vector<2x8xf32> -> vector<2x16xf32>
    %cst_31 = arith.constant dense<0.000000e+00> : vector<2x8xf32>
    %100 = tpu.matmul %99, %3, %cst_31 {dimension_numbers = #tpu.dot_dimension_numbers<[1], [0], [0], [1], [0, 0, 1, 1], [], []>} : vector<2x16xf32>, vector<16x8xf32>, vector<2x8xf32> -> vector<2x8xf32>
    %101 = arith.addf %100, %19 : vector<2x8xf32>
    %102 = math.tanh %101 : vector<2x8xf32>
    %c0_32 = arith.constant 0 : index
    %c6 = arith.constant 6 : index
    %c0_33 = arith.constant 0 : index
    %103 = vector.load %arg3[%c0_32, %c6, %c0_33] : memref<2x8x8xf32, #tpu.memory_space<vmem>>, vector<2x1x8xf32>
    %104 = vector.shape_cast %103 : vector<2x1x8xf32> to vector<2x8xf32>
    %105 = vector.shape_cast %102 : vector<2x8xf32> to vector<2x1x8xf32>
    tpu.vector_store %arg3[%c0_32, %c6, %c0_33], %105 {strides = array<i32>} : memref<2x8x8xf32, #tpu.memory_space<vmem>>, vector<2x1x8xf32>,
    %106 = vector.extract_strided_slice %17 {offsets = [0, 7, 0], sizes = [2, 1, 8], strides = [1, 1, 1]} : vector<2x8x8xf32> to vector<2x1x8xf32>
    %107 = vector.shape_cast %106 : vector<2x1x8xf32> to vector<2x8xf32>
    %cst_34 = arith.constant dense<0.000000e+00> : vector<2x8xf32>
    %108 = tpu.matmul %98, %2, %cst_34 {dimension_numbers = #tpu.dot_dimension_numbers<[1], [0], [0], [1], [0, 0, 1, 1], [], []>} : vector<2x8xf32>, vector<8x8xf32>, vector<2x8xf32> -> vector<2x8xf32>
    %109 = arith.addf %107, %108 : vector<2x8xf32>
    %110 = math.tanh %109 : vector<2x8xf32>
    %111 = tpu.concatenate %110, %102 in 1 : vector<2x8xf32>, vector<2x8xf32> -> vector<2x16xf32>
    %cst_35 = arith.constant dense<0.000000e+00> : vector<2x8xf32>
    %112 = tpu.matmul %111, %3, %cst_35 {dimension_numbers = #tpu.dot_dimension_numbers<[1], [0], [0], [1], [0, 0, 1, 1], [], []>} : vector<2x16xf32>, vector<16x8xf32>, vector<2x8xf32> -> vector<2x8xf32>
    %113 = arith.addf %112, %19 : vector<2x8xf32>
    %114 = math.tanh %113 : vector<2x8xf32>
    %c0_36 = arith.constant 0 : index
    %c7 = arith.constant 7 : index
    %c0_37 = arith.constant 0 : index
    %115 = vector.load %arg3[%c0_36, %c7, %c0_37] : memref<2x8x8xf32, #tpu.memory_space<vmem>>, vector<2x1x8xf32>
    %116 = vector.shape_cast %115 : vector<2x1x8xf32> to vector<2x8xf32>
    %117 = vector.shape_cast %114 : vector<2x8xf32> to vector<2x1x8xf32>
    tpu.vector_store %arg3[%c0_36, %c7, %c0_37], %117 {strides = array<i32>} : memref<2x8x8xf32, #tpu.memory_space<vmem>>, vector<2x1x8xf32>,
    %c0_38 = arith.constant 0 : index
    %c0_39 = arith.constant 0 : index
    %c0_40 = arith.constant 0 : index
    %118 = vector.load %arg3[%c0_38, %c0_39, %c0_40] : memref<2x8x8xf32, #tpu.memory_space<vmem>>, vector<2x8x8xf32>
    %119 = vector.shape_cast %118 : vector<2x8x8xf32> to vector<16x8xf32>
    %cst_41 = arith.constant dense<0.000000e+00> : vector<16x8xf32>
    %120 = tpu.matmul %119, %4, %cst_41 {dimension_numbers = #tpu.dot_dimension_numbers<[1], [0], [0], [1], [0, 0, 1, 1], [], []>} : vector<16x8xf32>, vector<8x8xf32>, vector<16x8xf32> -> vector<16x8xf32>
    %121 = vector.shape_cast %6 : vector<1x8xf32> to vector<1x8xf32>
    %122 = vector.broadcast %121 : vector<1x8xf32> to vector<16x8xf32>
    %123 = arith.addf %120, %122 : vector<16x8xf32>
    %124 = vector.extract_strided_slice %123 {offsets = [0, 0], sizes = [16, 4], strides = [1, 1]} : vector<16x8xf32> to vector<16x4xf32>
    %c0_42 = arith.constant 0 : index
    %c0_43 = arith.constant 0 : index
    %125 = vector.load %arg2[%c0_42, %c0_43] : memref<16x4xf32, #tpu.memory_space<vmem>>, vector<16x4xf32>
    tpu.vector_store %arg2[%c0_42, %c0_43], %124 {strides = array<i32>} : memref<16x4xf32, #tpu.memory_space<vmem>>, vector<16x4xf32>,
    return
  }
}

</mosaic_0001>

<llo_original>
// kernel: tpu_custom_call.1
$region0: #{tpu_custom_call.1}
  #allocation0 [shape = 'u32[]', space=smem, size = 0x4, offset = 0x4, fixed_abs, tag = 'smem constant byte address 0x4 - core index']
  #allocation1 [shape = 'u32[72,128]{1,0:T(1,128)}', space=vmem, size = 0x9000, scoped, tag = 'internal scratch']
  #allocation2 [shape = 'f32[2,8,8]{2,1,0:T(8,128)}', space=vmem, size = 0x2000, scoped, tag = 'scratch operand']
  %s0 = inlined_call_operand.vmem [shape: s32[16,1], index: 0, kind: input, shape index: {}]
  %s1 = inlined_call_operand.vmem [shape: f32[48,8], index: 1, kind: input, shape index: {}]
  %s2 = inlined_call_operand.vmem [shape: f32[16,4], index: 2, kind: output, shape index: {}]
  %s3 = sld [smem:[#allocation0]]
  $region18: #{tpu_custom_call.1} parent=0
    _
  %s5 = ssub.s32 1, %s3
  %s6 = scalar_select 0, %s5, %s3
  // Predicated region
  $region2: #{tpu_custom_call.1} parent=0 // pred_check
    _
  $region3: #{tpu_custom_call.1} parent=0 // pred_check_branch
    %8 = sbr.rel (0) target = $region5
  $region4: #{tpu_custom_call.1} parent=0 // pred_region
    _
  $region5: #{tpu_custom_call.1} parent=0 // pred_fallthru
    _
  // Predicated region
  $region6: #{tpu_custom_call.1} parent=0 // pred_check
    _
  $region7: #{tpu_custom_call.1} parent=0 // pred_check_branch
    %10 = sbr.rel (0) target = $region9
  $region8: #{tpu_custom_call.1} parent=0 // pred_region
    _
  $region9: #{tpu_custom_call.1} parent=0 // pred_fallthru
    _
  %v11 = vld [vmem:[%s1] sm:$0xff]
  %v12 = vld [vmem:[%s1 + $0x8] sm:$0xff]
  %v13 = vld [vmem:[%s1 + $0x10] sm:$0xff]
  %v14 = vld [vmem:[%s1 + $0x18] sm:$0xff]
  %v15 = vld [vmem:[%s1 + $0x20] sm:$0xff]
  %v16 = vld [vmem:[%s1 + $0x28] sm:$0xff]
  %v17 = vld [vmem:[%s0] sm:$0xff]
  %v18 = vld [vmem:[%s0 + $0x8] sm:$0xff]
  %v19 = vlaneseq
  %v20 = vand.u32 %v19, 127
  %21 = vset.pattern.permute.xlu0 0
  %22 = vperm.xlu0 %21, %v17
  %v23 = vpop.permute.xlu0 %22
  %24 = vset.pattern.permute.xlu0 0
  %25 = vperm.xlu0 %24, %v18
  %v26 = vpop.permute.xlu0 %25
  %vm27 = vcmp.eq.s32.totalorder %v23, %v20
  %vm28 = vcmp.eq.s32.totalorder %v26, %v20
  %vm29 = vcmp.eq.s32.totalorder %v20, 7
  %vm30 = vmor %vm27, %vm29
  %vm31 = vmor %vm28, %vm29
  %v32 = vsel %vm30, 1, 0
  %v33 = vsel %vm31, 1, 0
  %v34 = vcvt.s32.f32 %v32
  %v35 = vcvt.s32.f32 %v33
  %vm36 = vcmask 64512
  %v38 = vsel %vm36, %v34, 0
  %v41 = vsel %vm36, %v35, 0
  %43 = vmatpush.msra.mxu0 0.0
  %44 = vmatpush.msra.mxu0 0.0
  %45 = vmatpush.msra.mxu0 0.0
  %46 = vmatpush.msra.mxu0 0.0
  %47 = vmatpush.msra.mxu0 0.0
  %48 = vmatpush.msra.mxu0 0.0
  %49 = vmatpush.msra.mxu0 0.0
  %50 = vmatpush.msra.mxu0 0.0
  %51 = vmatpush.msra.mxu0 0.0
  %52 = vmatpush.msra.mxu0 0.0
  %53 = vmatpush.msra.mxu0 0.0
  %54 = vmatpush.msra.mxu0 0.0
  %55 = vmatpush.msra.mxu0 0.0
  %56 = vmatpush.msra.mxu0 0.0
  %57 = vmatpush.msra.mxu0 0.0
  %58 = vmatpush.msra.mxu0 %v11
  %59 = vmatmul.f32.gmra.mxu0 %v38
  %v60 = vpop.f32.mrf.mxu0
  %v61 = vadd.f32 0.0, %v60
  %62 = vmatmul.f32.gmra.mxu0 %v41
  %v63 = vpop.f32.mrf.mxu0
  %v64 = vadd.f32 0.0, %v63
  %65 = vdwg.mxu0
  %v66 = vperm.slane %v16, 0
  %v68 = vsel %vm36, 0.0, 0
  %70 = vmatpush.msra.mxu0 0.0
  %71 = vmatpush.msra.mxu0 0.0
  %72 = vmatpush.msra.mxu0 0.0
  %73 = vmatpush.msra.mxu0 0.0
  %74 = vmatpush.msra.mxu0 0.0
  %75 = vmatpush.msra.mxu0 0.0
  %76 = vmatpush.msra.mxu0 0.0
  %77 = vmatpush.msra.mxu0 0.0
  %78 = vmatpush.msra.mxu0 0.0
  %79 = vmatpush.msra.mxu0 0.0
  %80 = vmatpush.msra.mxu0 0.0
  %81 = vmatpush.msra.mxu0 0.0
  %82 = vmatpush.msra.mxu0 0.0
  %83 = vmatpush.msra.mxu0 0.0
  %84 = vmatpush.msra.mxu0 0.0
  %85 = vmatpush.msra.mxu0 %v12
  %86 = vmatmul.f32.gmra.mxu0 %v68
  %v87 = vpop.f32.mrf.mxu0
  %v88 = vadd.f32 0.0, %v87
  %89 = vdwg.mxu0
  %v91 = vrot.slane %v88, 1
  %v94 = vadd.f32 %v61, %v88
  %v95 = vadd.f32 %v64, %v91
  %v96 = vtanh.pop %v94
  %v97 = vtanh.pop %v95
  %v100 = vrot.slane %v97, 7
  %vm101 = vcmask 1041409
  %v102 = vsel %vm101, %v100, %v96
  %v104 = vsel %vm36, %v102, 0.0
  %vm105 = vcmask 130048
  %v107 = vsel %vm105, %v104, 0
  %109 = vmatpush.msra.mxu0 0.0
  %110 = vmatpush.msra.mxu0 0.0
  %111 = vmatpush.msra.mxu0 0.0
  %112 = vmatpush.msra.mxu0 0.0
  %113 = vmatpush.msra.mxu0 0.0
  %114 = vmatpush.msra.mxu0 0.0
  %115 = vmatpush.msra.mxu0 0.0
  %116 = vmatpush.msra.mxu0 0.0
  %117 = vmatpush.msra.mxu0 0.0
  %118 = vmatpush.msra.mxu0 0.0
  %119 = vmatpush.msra.mxu0 0.0
  %120 = vmatpush.msra.mxu0 0.0
  %121 = vmatpush.msra.mxu0 0.0
  %122 = vmatpush.msra.mxu0 0.0
  %123 = vmatpush.msra.mxu0 %v14
  %124 = vmatpush.msra.mxu0 %v13
  %125 = vmatmul.f32.gmra.mxu0 %v107
  %v126 = vpop.f32.mrf.mxu0
  %v127 = vadd.f32 %v66, %v126
  %128 = vdwg.mxu0
  %v129 = vtanh.pop %v127
  %v131 = vrot.slane %v129, 1
  %vm133 = vcmask 57344
  %134 = vst.msk [vmem:[#allocation2] sm:$0x1] %vm133, %v129
  %135 = vst.msk [vmem:[#allocation2 + $0x8] sm:$0x1] %vm133, %v131
  %v136 = vsel %vm36, %v102, 0
  %138 = vmatpush.msra.mxu0 0.0
  %139 = vmatpush.msra.mxu0 0.0
  %140 = vmatpush.msra.mxu0 0.0
  %141 = vmatpush.msra.mxu0 0.0
  %142 = vmatpush.msra.mxu0 0.0
  %143 = vmatpush.msra.mxu0 0.0
  %144 = vmatpush.msra.mxu0 0.0
  %145 = vmatpush.msra.mxu0 0.0
  %146 = vmatpush.msra.mxu0 0.0
  %147 = vmatpush.msra.mxu0 0.0
  %148 = vmatpush.msra.mxu0 0.0
  %149 = vmatpush.msra.mxu0 0.0
  %150 = vmatpush.msra.mxu0 0.0
  %151 = vmatpush.msra.mxu0 0.0
  %152 = vmatpush.msra.mxu0 0.0
  %153 = vmatpush.msra.mxu0 %v12
  %154 = vmatmul.f32.gmra.mxu0 %v136
  %v155 = vpop.f32.mrf.mxu0
  %v156 = vadd.f32 0.0, %v155
  %157 = vdwg.mxu0
  %v159 = vrot.slane %v156, 7
  %v162 = vadd.f32 %v61, %v159
  %v163 = vadd.f32 %v64, %v156
  %v164 = vtanh.pop %v162
  %v165 = vtanh.pop %v163
  %v168 = vrot.slane %v165, 7
  %vm169 = vcmask 1042434
  %v170 = vsel %vm169, %v168, %v164
  %v172 = vrot.slane %v129, 7
  %173 = vrot.lane.b32.xlu0 %v172, 8
  %v174 = vpop.permute.xlu0 %173
  %v176 = vsel %vm36, %v170, %v174
  %v178 = vrot.slane %v176, 1
  %v179 = vsel %vm105, %v178, 0
  %181 = vmatpush.msra.mxu0 0.0
  %182 = vmatpush.msra.mxu0 0.0
  %183 = vmatpush.msra.mxu0 0.0
  %184 = vmatpush.msra.mxu0 0.0
  %185 = vmatpush.msra.mxu0 0.0
  %186 = vmatpush.msra.mxu0 0.0
  %187 = vmatpush.msra.mxu0 0.0
  %188 = vmatpush.msra.mxu0 0.0
  %189 = vmatpush.msra.mxu0 0.0
  %190 = vmatpush.msra.mxu0 0.0
  %191 = vmatpush.msra.mxu0 0.0
  %192 = vmatpush.msra.mxu0 0.0
  %193 = vmatpush.msra.mxu0 0.0
  %194 = vmatpush.msra.mxu0 0.0
  %195 = vmatpush.msra.mxu0 %v14
  %196 = vmatpush.msra.mxu0 %v13
  %197 = vmatmul.f32.gmra.mxu0 %v179
  %v198 = vpop.f32.mrf.mxu0
  %v199 = vadd.f32 %v66, %v198
  %200 = vdwg.mxu0
  %v201 = vtanh.pop %v199
  %v203 = vrot.slane %v201, 1
  %205 = vst.msk [vmem:[#allocation2 + $0x1] sm:$0x1] %vm133, %v201
  %206 = vst.msk [vmem:[#allocation2 + $0x9] sm:$0x1] %vm133, %v203
  %v207 = vrot.slane %v164, 1
  %v208 = vsel %vm101, %v165, %v207
  %v209 = vsel %vm36, %v208, 0
  %211 = vmatpush.msra.mxu0 0.0
  %212 = vmatpush.msra.mxu0 0.0
  %213 = vmatpush.msra.mxu0 0.0
  %214 = vmatpush.msra.mxu0 0.0
  %215 = vmatpush.msra.mxu0 0.0
  %216 = vmatpush.msra.mxu0 0.0
  %217 = vmatpush.msra.mxu0 0.0
  %218 = vmatpush.msra.mxu0 0.0
  %219 = vmatpush.msra.mxu0 0.0
  %220 = vmatpush.msra.mxu0 0.0
  %221 = vmatpush.msra.mxu0 0.0
  %222 = vmatpush.msra.mxu0 0.0
  %223 = vmatpush.msra.mxu0 0.0
  %224 = vmatpush.msra.mxu0 0.0
  %225 = vmatpush.msra.mxu0 0.0
  %226 = vmatpush.msra.mxu0 %v12
  %227 = vmatmul.f32.gmra.mxu0 %v209
  %v228 = vpop.f32.mrf.mxu0
  %v229 = vadd.f32 0.0, %v228
  %230 = vdwg.mxu0
  %v232 = vrot.slane %v229, 6
  %v233 = vrot.slane %v229, 7
  %v236 = vadd.f32 %v61, %v232
  %v237 = vadd.f32 %v64, %v233
  %v238 = vtanh.pop %v236
  %v239 = vtanh.pop %v237
  %v242 = vrot.slane %v239, 7
  %vm243 = vcmask 1043459
  %v244 = vsel %vm243, %v242, %v238
  %v246 = vrot.slane %v201, 6
  %247 = vrot.lane.b32.xlu0 %v246, 8
  %v248 = vpop.permute.xlu0 %247
  %v250 = vsel %vm36, %v244, %v248
  %v252 = vrot.slane %v250, 2
  %v253 = vsel %vm105, %v252, 0
  %255 = vmatpush.msra.mxu0 0.0
  %256 = vmatpush.msra.mxu0 0.0
  %257 = vmatpush.msra.mxu0 0.0
  %258 = vmatpush.msra.mxu0 0.0
  %259 = vmatpush.msra.mxu0 0.0
  %260 = vmatpush.msra.mxu0 0.0
  %261 = vmatpush.msra.mxu0 0.0
  %262 = vmatpush.msra.mxu0 0.0
  %263 = vmatpush.msra.mxu0 0.0
  %264 = vmatpush.msra.mxu0 0.0
  %265 = vmatpush.msra.mxu0 0.0
  %266 = vmatpush.msra.mxu0 0.0
  %267 = vmatpush.msra.mxu0 0.0
  %268 = vmatpush.msra.mxu0 0.0
  %269 = vmatpush.msra.mxu0 %v14
  %270 = vmatpush.msra.mxu0 %v13
  %271 = vmatmul.f32.gmra.mxu0 %v253
  %v272 = vpop.f32.mrf.mxu0
  %v273 = vadd.f32 %v66, %v272
  %274 = vdwg.mxu0
  %v275 = vtanh.pop %v273
  %v277 = vrot.slane %v275, 1
  %279 = vst.msk [vmem:[#allocation2 + $0x2] sm:$0x1] %vm133, %v275
  %280 = vst.msk [vmem:[#allocation2 + $0xa] sm:$0x1] %vm133, %v277
  %v281 = vrot.slane %v238, 2
  %v282 = vrot.slane %v239, 1
  %v283 = vsel %vm101, %v282, %v281
  %v284 = vsel %vm36, %v283, 0
  %286 = vmatpush.msra.mxu0 0.0
  %287 = vmatpush.msra.mxu0 0.0
  %288 = vmatpush.msra.mxu0 0.0
  %289 = vmatpush.msra.mxu0 0.0
  %290 = vmatpush.msra.mxu0 0.0
  %291 = vmatpush.msra.mxu0 0.0
  %292 = vmatpush.msra.mxu0 0.0
  %293 = vmatpush.msra.mxu0 0.0
  %294 = vmatpush.msra.mxu0 0.0
  %295 = vmatpush.msra.mxu0 0.0
  %296 = vmatpush.msra.mxu0 0.0
  %297 = vmatpush.msra.mxu0 0.0
  %298 = vmatpush.msra.mxu0 0.0
  %299 = vmatpush.msra.mxu0 0.0
  %300 = vmatpush.msra.mxu0 0.0
  %301 = vmatpush.msra.mxu0 %v12
  %302 = vmatmul.f32.gmra.mxu0 %v284
  %v303 = vpop.f32.mrf.mxu0
  %v304 = vadd.f32 0.0, %v303
  %305 = vdwg.mxu0
  %v307 = vrot.slane %v304, 5
  %v308 = vrot.slane %v304, 6
  %v311 = vadd.f32 %v61, %v307
  %v312 = vadd.f32 %v64, %v308
  %v313 = vtanh.pop %v311
  %v314 = vtanh.pop %v312
  %v317 = vrot.slane %v314, 7
  %vm318 = vcmask 1044484
  %v319 = vsel %vm318, %v317, %v313
  %v321 = vrot.slane %v275, 5
  %322 = vrot.lane.b32.xlu0 %v321, 8
  %v323 = vpop.permute.xlu0 %322
  %v325 = vsel %vm36, %v319, %v323
  %v327 = vrot.slane %v325, 3
  %v328 = vsel %vm105, %v327, 0
  %330 = vmatpush.msra.mxu0 0.0
  %331 = vmatpush.msra.mxu0 0.0
  %332 = vmatpush.msra.mxu0 0.0
  %333 = vmatpush.msra.mxu0 0.0
  %334 = vmatpush.msra.mxu0 0.0
  %335 = vmatpush.msra.mxu0 0.0
  %336 = vmatpush.msra.mxu0 0.0
  %337 = vmatpush.msra.mxu0 0.0
  %338 = vmatpush.msra.mxu0 0.0
  %339 = vmatpush.msra.mxu0 0.0
  %340 = vmatpush.msra.mxu0 0.0
  %341 = vmatpush.msra.mxu0 0.0
  %342 = vmatpush.msra.mxu0 0.0
  %343 = vmatpush.msra.mxu0 0.0
  %344 = vmatpush.msra.mxu0 %v14
  %345 = vmatpush.msra.mxu0 %v13
  %346 = vmatmul.f32.gmra.mxu0 %v328
  %v347 = vpop.f32.mrf.mxu0
  %v348 = vadd.f32 %v66, %v347
  %349 = vdwg.mxu0
  %v350 = vtanh.pop %v348
  %v352 = vrot.slane %v350, 1
  %354 = vst.msk [vmem:[#allocation2 + $0x3] sm:$0x1] %vm133, %v350
  %355 = vst.msk [vmem:[#allocation2 + $0xb] sm:$0x1] %vm133, %v352
  %v356 = vrot.slane %v313, 3
  %v357 = vrot.slane %v314, 2
  %v358 = vsel %vm101, %v357, %v356
  %v359 = vsel %vm36, %v358, 0
  %361 = vmatpush.msra.mxu0 0.0
  %362 = vmatpush.msra.mxu0 0.0
  %363 = vmatpush.msra.mxu0 0.0
  %364 = vmatpush.msra.mxu0 0.0
  %365 = vmatpush.msra.mxu0 0.0
  %366 = vmatpush.msra.mxu0 0.0
  %367 = vmatpush.msra.mxu0 0.0
  %368 = vmatpush.msra.mxu0 0.0
  %369 = vmatpush.msra.mxu0 0.0
  %370 = vmatpush.msra.mxu0 0.0
  %371 = vmatpush.msra.mxu0 0.0
  %372 = vmatpush.msra.mxu0 0.0
  %373 = vmatpush.msra.mxu0 0.0
  %374 = vmatpush.msra.mxu0 0.0
  %375 = vmatpush.msra.mxu0 0.0
  %376 = vmatpush.msra.mxu0 %v12
  %377 = vmatmul.f32.gmra.mxu0 %v359
  %v378 = vpop.f32.mrf.mxu0
  %v379 = vadd.f32 0.0, %v378
  %380 = vdwg.mxu0
  %v382 = vrot.slane %v379, 4
  %v383 = vrot.slane %v379, 5
  %v386 = vadd.f32 %v61, %v382
  %v387 = vadd.f32 %v64, %v383
  %v388 = vtanh.pop %v386
  %v389 = vtanh.pop %v387
  %v392 = vrot.slane %v389, 7
  %vm393 = vcmask 1045509
  %v394 = vsel %vm393, %v392, %v388
  %v396 = vrot.slane %v350, 4
  %397 = vrot.lane.b32.xlu0 %v396, 8
  %v398 = vpop.permute.xlu0 %397
  %v400 = vsel %vm36, %v394, %v398
  %v402 = vrot.slane %v400, 4
  %v403 = vsel %vm105, %v402, 0
  %405 = vmatpush.msra.mxu0 0.0
  %406 = vmatpush.msra.mxu0 0.0
  %407 = vmatpush.msra.mxu0 0.0
  %408 = vmatpush.msra.mxu0 0.0
  %409 = vmatpush.msra.mxu0 0.0
  %410 = vmatpush.msra.mxu0 0.0
  %411 = vmatpush.msra.mxu0 0.0
  %412 = vmatpush.msra.mxu0 0.0
  %413 = vmatpush.msra.mxu0 0.0
  %414 = vmatpush.msra.mxu0 0.0
  %415 = vmatpush.msra.mxu0 0.0
  %416 = vmatpush.msra.mxu0 0.0
  %417 = vmatpush.msra.mxu0 0.0
  %418 = vmatpush.msra.mxu0 0.0
  %419 = vmatpush.msra.mxu0 %v14
  %420 = vmatpush.msra.mxu0 %v13
  %421 = vmatmul.f32.gmra.mxu0 %v403
  %v422 = vpop.f32.mrf.mxu0
  %v423 = vadd.f32 %v66, %v422
  %424 = vdwg.mxu0
  %v425 = vtanh.pop %v423
  %v427 = vrot.slane %v425, 1
  %429 = vst.msk [vmem:[#allocation2 + $0x4] sm:$0x1] %vm133, %v425
  %430 = vst.msk [vmem:[#allocation2 + $0xc] sm:$0x1] %vm133, %v427
  %v431 = vrot.slane %v388, 4
  %v432 = vrot.slane %v389, 3
  %v433 = vsel %vm101, %v432, %v431
  %v434 = vsel %vm36, %v433, 0
  %436 = vmatpush.msra.mxu0 0.0
  %437 = vmatpush.msra.mxu0 0.0
  %438 = vmatpush.msra.mxu0 0.0
  %439 = vmatpush.msra.mxu0 0.0
  %440 = vmatpush.msra.mxu0 0.0
  %441 = vmatpush.msra.mxu0 0.0
  %442 = vmatpush.msra.mxu0 0.0
  %443 = vmatpush.msra.mxu0 0.0
  %444 = vmatpush.msra.mxu0 0.0
  %445 = vmatpush.msra.mxu0 0.0
  %446 = vmatpush.msra.mxu0 0.0
  %447 = vmatpush.msra.mxu0 0.0
  %448 = vmatpush.msra.mxu0 0.0
  %449 = vmatpush.msra.mxu0 0.0
  %450 = vmatpush.msra.mxu0 0.0
  %451 = vmatpush.msra.mxu0 %v12
  %452 = vmatmul.f32.gmra.mxu0 %v434
  %v453 = vpop.f32.mrf.mxu0
  %v454 = vadd.f32 0.0, %v453
  %455 = vdwg.mxu0
  %v457 = vrot.slane %v454, 3
  %v458 = vrot.slane %v454, 4
  %v461 = vadd.f32 %v61, %v457
  %v462 = vadd.f32 %v64, %v458
  %v463 = vtanh.pop %v461
  %v464 = vtanh.pop %v462
  %v467 = vrot.slane %v464, 7
  %vm468 = vcmask 1046534
  %v469 = vsel %vm468, %v467, %v463
  %v471 = vrot.slane %v425, 3
  %472 = vrot.lane.b32.xlu0 %v471, 8
  %v473 = vpop.permute.xlu0 %472
  %v475 = vsel %vm36, %v469, %v473
  %v477 = vrot.slane %v475, 5
  %v478 = vsel %vm105, %v477, 0
  %480 = vmatpush.msra.mxu0 0.0
  %481 = vmatpush.msra.mxu0 0.0
  %482 = vmatpush.msra.mxu0 0.0
  %483 = vmatpush.msra.mxu0 0.0
  %484 = vmatpush.msra.mxu0 0.0
  %485 = vmatpush.msra.mxu0 0.0
  %486 = vmatpush.msra.mxu0 0.0
  %487 = vmatpush.msra.mxu0 0.0
  %488 = vmatpush.msra.mxu0 0.0
  %489 = vmatpush.msra.mxu0 0.0
  %490 = vmatpush.msra.mxu0 0.0
  %491 = vmatpush.msra.mxu0 0.0
  %492 = vmatpush.msra.mxu0 0.0
  %493 = vmatpush.msra.mxu0 0.0
  %494 = vmatpush.msra.mxu0 %v14
  %495 = vmatpush.msra.mxu0 %v13
  %496 = vmatmul.f32.gmra.mxu0 %v478
  %v497 = vpop.f32.mrf.mxu0
  %v498 = vadd.f32 %v66, %v497
  %499 = vdwg.mxu0
  %v500 = vtanh.pop %v498
  %v502 = vrot.slane %v500, 1
  %504 = vst.msk [vmem:[#allocation2 + $0x5] sm:$0x1] %vm133, %v500
  %505 = vst.msk [vmem:[#allocation2 + $0xd] sm:$0x1] %vm133, %v502
  %v506 = vrot.slane %v463, 5
  %v507 = vrot.slane %v464, 4
  %v508 = vsel %vm101, %v507, %v506
  %v509 = vsel %vm36, %v508, 0
  %511 = vmatpush.msra.mxu0 0.0
  %512 = vmatpush.msra.mxu0 0.0
  %513 = vmatpush.msra.mxu0 0.0
  %514 = vmatpush.msra.mxu0 0.0
  %515 = vmatpush.msra.mxu0 0.0
  %516 = vmatpush.msra.mxu0 0.0
  %517 = vmatpush.msra.mxu0 0.0
  %518 = vmatpush.msra.mxu0 0.0
  %519 = vmatpush.msra.mxu0 0.0
  %520 = vmatpush.msra.mxu0 0.0
  %521 = vmatpush.msra.mxu0 0.0
  %522 = vmatpush.msra.mxu0 0.0
  %523 = vmatpush.msra.mxu0 0.0
  %524 = vmatpush.msra.mxu0 0.0
  %525 = vmatpush.msra.mxu0 0.0
  %526 = vmatpush.msra.mxu0 %v12
  %527 = vmatmul.f32.gmra.mxu0 %v509
  %v528 = vpop.f32.mrf.mxu0
  %v529 = vadd.f32 0.0, %v528
  %530 = vdwg.mxu0
  %v532 = vrot.slane %v529, 2
  %v533 = vrot.slane %v529, 3
  %v536 = vadd.f32 %v61, %v532
  %v537 = vadd.f32 %v64, %v533
  %v538 = vtanh.pop %v536
  %v539 = vtanh.pop %v537
  %v542 = vrot.slane %v539, 7
  %vm543 = vcmask 1047559
  %v544 = vsel %vm543, %v542, %v538
  %v546 = vrot.slane %v500, 2
  %547 = vrot.lane.b32.xlu0 %v546, 8
  %v548 = vpop.permute.xlu0 %547
  %v550 = vsel %vm36, %v544, %v548
  %v552 = vrot.slane %v550, 6
  %v553 = vsel %vm105, %v552, 0
  %555 = vmatpush.msra.mxu0 0.0
  %556 = vmatpush.msra.mxu0 0.0
  %557 = vmatpush.msra.mxu0 0.0
  %558 = vmatpush.msra.mxu0 0.0
  %559 = vmatpush.msra.mxu0 0.0
  %560 = vmatpush.msra.mxu0 0.0
  %561 = vmatpush.msra.mxu0 0.0
  %562 = vmatpush.msra.mxu0 0.0
  %563 = vmatpush.msra.mxu0 0.0
  %564 = vmatpush.msra.mxu0 0.0
  %565 = vmatpush.msra.mxu0 0.0
  %566 = vmatpush.msra.mxu0 0.0
  %567 = vmatpush.msra.mxu0 0.0
  %568 = vmatpush.msra.mxu0 0.0
  %569 = vmatpush.msra.mxu0 %v14
  %570 = vmatpush.msra.mxu0 %v13
  %571 = vmatmul.f32.gmra.mxu0 %v553
  %v572 = vpop.f32.mrf.mxu0
  %v573 = vadd.f32 %v66, %v572
  %574 = vdwg.mxu0
  %v575 = vtanh.pop %v573
  %v577 = vrot.slane %v575, 1
  %579 = vst.msk [vmem:[#allocation2 + $0x6] sm:$0x1] %vm133, %v575
  %580 = vst.msk [vmem:[#allocation2 + $0xe] sm:$0x1] %vm133, %v577
  %v581 = vrot.slane %v538, 6
  %v582 = vrot.slane %v539, 5
  %v583 = vsel %vm101, %v582, %v581
  %v584 = vsel %vm36, %v583, 0
  %586 = vmatpush.msra.mxu0 0.0
  %587 = vmatpush.msra.mxu0 0.0
  %588 = vmatpush.msra.mxu0 0.0
  %589 = vmatpush.msra.mxu0 0.0
  %590 = vmatpush.msra.mxu0 0.0
  %591 = vmatpush.msra.mxu0 0.0
  %592 = vmatpush.msra.mxu0 0.0
  %593 = vmatpush.msra.mxu0 0.0
  %594 = vmatpush.msra.mxu0 0.0
  %595 = vmatpush.msra.mxu0 0.0
  %596 = vmatpush.msra.mxu0 0.0
  %597 = vmatpush.msra.mxu0 0.0
  %598 = vmatpush.msra.mxu0 0.0
  %599 = vmatpush.msra.mxu0 0.0
  %600 = vmatpush.msra.mxu0 0.0
  %601 = vmatpush.msra.mxu0 %v12
  %602 = vmatmul.f32.gmra.mxu0 %v584
  %v603 = vpop.f32.mrf.mxu0
  %v604 = vadd.f32 0.0, %v603
  %605 = vdwg.mxu0
  %v607 = vrot.slane %v604, 1
  %v608 = vrot.slane %v604, 2
  %v611 = vadd.f32 %v61, %v607
  %v612 = vadd.f32 %v64, %v608
  %v613 = vtanh.pop %v611
  %v614 = vtanh.pop %v612
  %v617 = vrot.slane %v614, 7
  %620 = vrot.lane.b32.xlu0 %v577, 8
  %v621 = vpop.permute.xlu0 %620
  %v623 = vsel %vm36, %v613, %v621
  %v624 = vsel %vm36, %v617, %v621
  %vm627 = vcmask 1040384
  %v628 = vrot.slane %v623, 7
  %v629 = vrot.slane %v624, 7
  %v630 = vsel %vm627, %v628, %v629
  %v631 = vsel %vm105, %v630, 0
  %633 = vmatpush.msra.mxu0 0.0
  %634 = vmatpush.msra.mxu0 0.0
  %635 = vmatpush.msra.mxu0 0.0
  %636 = vmatpush.msra.mxu0 0.0
  %637 = vmatpush.msra.mxu0 0.0
  %638 = vmatpush.msra.mxu0 0.0
  %639 = vmatpush.msra.mxu0 0.0
  %640 = vmatpush.msra.mxu0 0.0
  %641 = vmatpush.msra.mxu0 0.0
  %642 = vmatpush.msra.mxu0 0.0
  %643 = vmatpush.msra.mxu0 0.0
  %644 = vmatpush.msra.mxu0 0.0
  %645 = vmatpush.msra.mxu0 0.0
  %646 = vmatpush.msra.mxu0 0.0
  %647 = vmatpush.msra.mxu0 %v14
  %648 = vmatpush.msra.mxu0 %v13
  %649 = vmatmul.f32.gmra.mxu0 %v631
  %v650 = vpop.f32.mrf.mxu0
  %v651 = vadd.f32 %v66, %v650
  %652 = vdwg.mxu0
  %v653 = vtanh.pop %v651
  %v655 = vrot.slane %v653, 1
  %657 = vst.msk [vmem:[#allocation2 + $0x7] sm:$0x1] %vm133, %v653
  %658 = vst.msk [vmem:[#allocation2 + $0xf] sm:$0x1] %vm133, %v655
  %v659 = vld [vmem:[#allocation2] sm:$0xff]
  %v660 = vld [vmem:[#allocation2 + $0x8] sm:$0xff]
  %v661 = vperm.slane %v16, 1
  %v663 = vsel %vm36, %v659, 0
  %v666 = vsel %vm36, %v660, 0
  %668 = vmatpush.msra.mxu0 0.0
  %669 = vmatpush.msra.mxu0 0.0
  %670 = vmatpush.msra.mxu0 0.0
  %671 = vmatpush.msra.mxu0 0.0
  %672 = vmatpush.msra.mxu0 0.0
  %673 = vmatpush.msra.mxu0 0.0
  %674 = vmatpush.msra.mxu0 0.0
  %675 = vmatpush.msra.mxu0 0.0
  %676 = vmatpush.msra.mxu0 0.0
  %677 = vmatpush.msra.mxu0 0.0
  %678 = vmatpush.msra.mxu0 0.0
  %679 = vmatpush.msra.mxu0 0.0
  %680 = vmatpush.msra.mxu0 0.0
  %681 = vmatpush.msra.mxu0 0.0
  %682 = vmatpush.msra.mxu0 0.0
  %683 = vmatpush.msra.mxu0 %v15
  %684 = vmatmul.f32.gmra.mxu0 %v663
  %v685 = vpop.f32.mrf.mxu0
  %v686 = vadd.f32 %v661, %v685
  %687 = vmatmul.f32.gmra.mxu0 %v666
  %v688 = vpop.f32.mrf.mxu0
  %v689 = vadd.f32 %v661, %v688
  %690 = vdwg.mxu0
  %vm691 = vcmask 31744
  %692 = vst.msk [vmem:[%s2] sm:$0xff] %vm691, %v686
  %693 = vst.msk [vmem:[%s2 + $0x8] sm:$0xff] %vm691, %v689
  // Predicated region
  $region10: #{tpu_custom_call.1} parent=0 // pred_check
    _
  $region11: #{tpu_custom_call.1} parent=0 // pred_check_branch
    %695 = sbr.rel (0) target = $region13
  $region12: #{tpu_custom_call.1} parent=0 // pred_region
    _
  $region13: #{tpu_custom_call.1} parent=0 // pred_fallthru
    _
  // Predicated region
  $region14: #{tpu_custom_call.1} parent=0 // pred_check
    _
  $region15: #{tpu_custom_call.1} parent=0 // pred_check_branch
    %697 = sbr.rel (0) target = $region17
  $region16: #{tpu_custom_call.1} parent=0 // pred_region
    _
  $region17: #{tpu_custom_call.1} parent=0 // pred_fallthru
    _

</llo_original>
